<compile_context>
chip_gen: v7x
topology: tpu7x:2x2x1
jax: 0.10.0
libtpu: 0.0.40
codegen_flags: <defaults>
</compile_context>

<pallas_src>
import functools

import jax
import jax.numpy as jnp
from jax.experimental import pallas as pl
from jax.experimental.pallas import tpu as pltpu


def _layer_norm_kernel(x_ref, w_ref, b_ref, o_ref, *, eps):
    """Normalizes one (tm, H) row-tile over the last (hidden) axis.

    x_ref : (tm, H) input tile in VMEM
    w_ref : (1, H)  scale (gamma), f32
    b_ref : (1, H)  shift (beta),  f32
    o_ref : (tm, H) output tile
    """
    x = x_ref[...].astype(jnp.float32)
    mean = jnp.mean(x, axis=-1, keepdims=True)
    xc = x - mean
    var = jnp.mean(xc * xc, axis=-1, keepdims=True)
    inv = jax.lax.rsqrt(var + eps)                 # 1/sqrt(s + eps) on the EUP
    o_ref[...] = (w_ref[...] * (xc * inv) + b_ref[...]).astype(o_ref.dtype)


def _choose_tm(m, h, sublane):
    """Row-tile size: ~4 MiB/buffer at f32 width, >=8 grid steps when possible."""
    row_bytes = max(1, h) * 4            # budget as f32: kernel upcasts internally
    tm_cap = max(sublane, (4 << 20) // row_bytes)      # ~4 MiB per (tm, H) buffer
    tm_floor = max(sublane, (512 << 10) // row_bytes)  # don't shrink below ~512 KiB
    tm_steps = -(-m // 8)                # tm that yields ~8 grid steps
    tm = min(tm_cap, max(tm_floor, tm_steps))
    tm = -(-tm // sublane) * sublane     # round up to packed-sublane multiple
    tm = min(tm, -(-m // sublane) * sublane)           # never exceed (rounded) rows
    return max(sublane, tm)


def layer_norm(x, weight, bias, eps=1e-5):
    """Pallas LayerNorm over the last axis. x: (..., H), weight/bias: (H,)."""
    orig_shape = x.shape
    h = orig_shape[-1]
    assert weight.shape == (h,) and bias.shape == (h,)

    x2 = x.reshape(-1, h)
    m = x2.shape[0]

    itemsize = jnp.dtype(x2.dtype).itemsize
    sublane = max(8, 32 // itemsize)     # 8 for f32, 16 for bf16, 32 for int8
    tm = _choose_tm(m, h, sublane)
    grid = pl.cdiv(m, tm)                # ragged last block handled by Pallas

    w2 = weight.astype(jnp.float32).reshape(1, h)
    b2 = bias.astype(jnp.float32).reshape(1, h)

    kernel = functools.partial(_layer_norm_kernel, eps=float(eps))

    out = pl.pallas_call(
        kernel,
        out_shape=jax.ShapeDtypeStruct((m, h), x.dtype),
        grid_spec=pltpu.PrefetchScalarGridSpec(
            num_scalar_prefetch=0,
            grid=(grid,),
            in_specs=[
                pl.BlockSpec((tm, h), lambda i: (i, 0)),   # x row-tile
                pl.BlockSpec((1, h), lambda i: (0, 0)),    # weight (resident)
                pl.BlockSpec((1, h), lambda i: (0, 0)),    # bias (resident)
            ],
            out_specs=pl.BlockSpec((tm, h), lambda i: (i, 0)),
        ),
        compiler_params=pltpu.CompilerParams(
            # rows are independent: allow megacore / multi-TC sharding
            dimension_semantics=("parallel",),
            # explicit VMEM budget: fits big tiles + double buffering on
            # v5e/v6e defaults and stays under v7x's 64 MiB/TC physical VMEM
            vmem_limit_bytes=48 << 20,
        ),
    )(x2, w2, b2)

    return out.reshape(orig_shape)


def layer_norm_ref(x, weight, bias, eps=1e-5):
    u = jnp.mean(x, axis=-1, keepdims=True)
    s = jnp.mean((x - u) ** 2, axis=-1, keepdims=True)
    return weight * (x - u) / jnp.sqrt(s + eps) + bias


if __name__ == "__main__":
    key = jax.random.PRNGKey(0)
    k1, k2, k3 = jax.random.split(key, 3)

    # small shapes consistent with the module: (batch, seq, hidden)
    B, T, H = 2, 8, 128
    x = jax.random.normal(k1, (B, T, H), dtype=jnp.float32)
    weight = 1.0 + 0.1 * jax.random.normal(k2, (H,), dtype=jnp.float32)
    bias = 0.1 * jax.random.normal(k3, (H,), dtype=jnp.float32)

    out = layer_norm(x, weight, bias, eps=1e-5)
    out = jax.block_until_ready(out)

    ref = layer_norm_ref(x, weight, bias, eps=1e-5)
    assert jnp.allclose(out, ref, rtol=1e-5, atol=1e-5), float(
        jnp.max(jnp.abs(out - ref))
    )

    print("KERNEL_OK")
</pallas_src>

<mosaic_0001>
module attributes {stable_mosaic.version = 11 : i64} {
  func.func @_layer_norm_kernel(%arg0: i32, %arg1: memref<16x128xf32, #tpu.memory_space<vmem>>, %arg2: memref<1x128xf32, #tpu.memory_space<vmem>>, %arg3: memref<1x128xf32, #tpu.memory_space<vmem>>, %arg4: memref<16x128xf32, #tpu.memory_space<vmem>>) attributes {dimension_semantics = [#tpu.dimension_semantics<parallel>], iteration_bounds = array<i64: 1>, scalar_prefetch = 0 : i64, scratch_operands = 0 : i64, tpu.core_type = #tpu.core_type<tc>, window_params = [{transform_indices = @transform_0, window_bounds = array<i64: 16, 128>}, {pipeline_mode = #tpu.pipeline_mode<synchronous>, transform_indices = @transform_1, window_bounds = array<i64: 1, 128>}, {pipeline_mode = #tpu.pipeline_mode<synchronous>, transform_indices = @transform_2, window_bounds = array<i64: 1, 128>}, {transform_indices = @transform_3, window_bounds = array<i64: 16, 128>}]} {
    %c0 = arith.constant 0 : index
    %c0_0 = arith.constant 0 : index
    %0 = vector.load %arg1[%c0, %c0_0] : memref<16x128xf32, #tpu.memory_space<vmem>>, vector<16x128xf32>
    %cst = arith.constant dense<0.000000e+00> : vector<16xf32>
    %1 = vector.multi_reduction <add>, %0, %cst [1] : vector<16x128xf32> to vector<16xf32>
    %2 = vector.shape_cast %1 : vector<16xf32> to vector<16x1xf32>
    %cst_1 = arith.constant 1.280000e+02 : f32
    %3 = vector.broadcast %cst_1 : f32 to vector<16x1xf32>
    %4 = arith.divf %2, %3 : vector<16x1xf32>
    %5 = vector.broadcast %4 : vector<16x1xf32> to vector<16x128xf32>
    %6 = arith.subf %0, %5 : vector<16x128xf32>
    %7 = arith.mulf %6, %6 : vector<16x128xf32>
    %cst_2 = arith.constant dense<0.000000e+00> : vector<16xf32>
    %8 = vector.multi_reduction <add>, %7, %cst_2 [1] : vector<16x128xf32> to vector<16xf32>
    %9 = vector.shape_cast %8 : vector<16xf32> to vector<16x1xf32>
    %cst_3 = arith.constant 1.280000e+02 : f32
    %10 = vector.broadcast %cst_3 : f32 to vector<16x1xf32>
    %11 = arith.divf %9, %10 : vector<16x1xf32>
    %cst_4 = arith.constant 9.99999974E-6 : f32
    %12 = vector.broadcast %cst_4 : f32 to vector<16x1xf32>
    %13 = arith.addf %11, %12 : vector<16x1xf32>
    %14 = math.rsqrt %13 : vector<16x1xf32>
    %c0_5 = arith.constant 0 : index
    %c0_6 = arith.constant 0 : index
    %15 = vector.load %arg2[%c0_5, %c0_6] : memref<1x128xf32, #tpu.memory_space<vmem>>, vector<1x128xf32>
    %16 = vector.broadcast %14 : vector<16x1xf32> to vector<16x128xf32>
    %17 = arith.mulf %6, %16 : vector<16x128xf32>
    %18 = vector.broadcast %15 : vector<1x128xf32> to vector<16x128xf32>
    %19 = arith.mulf %18, %17 : vector<16x128xf32>
    %c0_7 = arith.constant 0 : index
    %c0_8 = arith.constant 0 : index
    %20 = vector.load %arg3[%c0_7, %c0_8] : memref<1x128xf32, #tpu.memory_space<vmem>>, vector<1x128xf32>
    %21 = vector.broadcast %20 : vector<1x128xf32> to vector<16x128xf32>
    %22 = arith.addf %19, %21 : vector<16x128xf32>
    %c0_9 = arith.constant 0 : index
    %c0_10 = arith.constant 0 : index
    %23 = vector.load %arg4[%c0_9, %c0_10] : memref<16x128xf32, #tpu.memory_space<vmem>>, vector<16x128xf32>
    tpu.vector_store %arg4[%c0_9, %c0_10], %22 {strides = array<i32>} : memref<16x128xf32, #tpu.memory_space<vmem>>, vector<16x128xf32>,
    return
  }
  func.func @transform_0(%arg0: i32) -> (i32, i32) {
    %c0_i32 = arith.constant 0 : i32
    %c0_i32_0 = arith.constant 0 : i32
    return %arg0, %c0_i32 : i32, i32
  }
  func.func @transform_1(%arg0: i32) -> (i32, i32) {
    %c0_i32 = arith.constant 0 : i32
    %c0_i32_0 = arith.constant 0 : i32
    %c0_i32_1 = arith.constant 0 : i32
    return %c0_i32, %c0_i32_0 : i32, i32
  }
  func.func @transform_2(%arg0: i32) -> (i32, i32) {
    %c0_i32 = arith.constant 0 : i32
    %c0_i32_0 = arith.constant 0 : i32
    %c0_i32_1 = arith.constant 0 : i32
    return %c0_i32, %c0_i32_0 : i32, i32
  }
  func.func @transform_3(%arg0: i32) -> (i32, i32) {
    %c0_i32 = arith.constant 0 : i32
    %c0_i32_0 = arith.constant 0 : i32
    return %arg0, %c0_i32 : i32, i32
  }
}

</mosaic_0001>

<llo_original>
// kernel: tpu_custom_call.1
$region0: #{tpu_custom_call.1}
  #allocation0 [shape = 'u32[]', space=smem, size = 0x4, offset = 0x4, fixed_abs, tag = 'smem constant byte address 0x4 - core index']
  #allocation1 [shape = 'u32[144,128]{1,0:T(1,128)}', space=vmem, size = 0x12000, scoped, tag = 'internal scratch']
  %s0 = inlined_call_operand.hbm [shape: f32[16,128], index: 0, kind: input, shape index: {}]
  %s1 = inlined_call_operand.vmem [shape: f32[1,128], index: 1, kind: input, shape index: {}]
  %s2 = inlined_call_operand.vmem [shape: f32[1,128], index: 2, kind: input, shape index: {}]
  %s3 = inlined_call_operand.hbm [shape: f32[16,128], index: 3, kind: output, shape index: {}]
  %s4 = sld [smem:[#allocation0]]
  $region26: #{tpu_custom_call.1} parent=0
    _
  %s6 = ssub.s32 1, %s4
  %s7 = scalar_select 0, %s6, %s4
  $region1: #{tpu_custom_call.1} parent=0
    #allocation2 [shape = 'u8[8192]{0}', space=vmem, size = 0x2000, scoped, tag = 'input window, operand 0, single buffered']
    #allocation3 [shape = 's32[1]{0}', space=sflag, size = 0x4, scoped, tag = 'scoped memory for tpu_custom_call.1']
    #allocation4 [shape = 's32[1]{0}', space=sflag, size = 0x4, scoped, tag = 'scoped memory for tpu_custom_call.1']
    #allocation5 [shape = 'u8[8192]{0}', space=vmem, size = 0x2000, scoped, tag = 'output window, operand 0, single buffered']
    %8 = vsyncpa [#allocation3], 0
    %9 = vsyncpa [#allocation4], 0
    // Predicated region
    $region2: #{tpu_custom_call.1} parent=1 // pred_check
      _
    $region3: #{tpu_custom_call.1} parent=1 // pred_check_branch
      %11 = sbr.rel (0) target = $region5
    $region4: #{tpu_custom_call.1} parent=1 // pred_region
      %s13 = ssub.s32 256, 256
      %14 = vsyncadd [#allocation3], %s13
      %s15 = sshll.u32 [#allocation2], 4
      %s16 = int_to_ptr.vmem [resolvable:$true] %s15
      %21 = dma.hbm_to_vmem [thread:$0]  %s0, 256, %s16, [#allocation3], 128, 128, 8
    $region5: #{tpu_custom_call.1} parent=1 // pred_fallthru
      _
    // Predicated region
    $region6: #{tpu_custom_call.1} parent=1 // pred_check
      _
    $region7: #{tpu_custom_call.1} parent=1 // pred_check_branch
      %23 = sbr.rel (0) target = $region9
    $region8: #{tpu_custom_call.1} parent=1 // pred_region
      _
    $region9: #{tpu_custom_call.1} parent=1 // pred_fallthru
      _
    // Predicated region
    $region10: #{tpu_custom_call.1} parent=1 // pred_check
      _
    $region11: #{tpu_custom_call.1} parent=1 // pred_check_branch
      %25 = sbr.rel (0) target = $region13
    $region12: #{tpu_custom_call.1} parent=1 // pred_region
      _
    $region13: #{tpu_custom_call.1} parent=1 // pred_fallthru
      _
    // Predicated region
    $region14: #{tpu_custom_call.1} parent=1 // pred_check
      _
    $region15: #{tpu_custom_call.1} parent=1 // pred_check_branch
      %27 = sbr.rel (0) target = $region17
    $region16: #{tpu_custom_call.1} parent=1 // pred_region
      %28 = dma.done [#allocation3], 256
    $region17: #{tpu_custom_call.1} parent=1 // pred_fallthru
      _
    %v29 = vld [vmem:[#allocation2] sm:$0xff]
    %v30 = vld [vmem:[#allocation2 + $0x8] sm:$0xff]
    %31 = vadd.xlane.f32.xlu0 %v29
    %v32 = vpop.xlane.xlu0 %31
    %33 = vadd.xlane.f32.xlu0 %v30
    %v34 = vpop.xlane.xlu0 %33
    %v35 = vrcp.pop 128.0
    %v36 = vmul.f32 %v32, %v35
    %v37 = vmul.f32 %v34, %v35
    %v38 = vsub.f32 %v29, %v36
    %v39 = vsub.f32 %v30, %v37
    %v40 = vmul.f32 %v38, %v38
    %v41 = vmul.f32 %v39, %v39
    %42 = vadd.xlane.f32.xlu0 %v40
    %v43 = vpop.xlane.xlu0 %42
    %44 = vadd.xlane.f32.xlu0 %v41
    %v45 = vpop.xlane.xlu0 %44
    %v46 = vmul.f32 %v43, %v35
    %v47 = vmul.f32 %v45, %v35
    %v48 = vadd.f32 %v46, 1e-05
    %v49 = vadd.f32 %v47, 1e-05
    %v50 = vrsqrt.pop %v48
    %v51 = vrsqrt.pop %v49
    %v52 = vld [vmem:[%s1] sm:$0x1]
    %v53 = vmul.f32 %v38, %v50
    %v54 = vmul.f32 %v39, %v51
    %v56 = vlaneseq
    %v57 = vshrl.u32 %v56, 7
    %v58 = vsub.s32 0, %v57
    %v59 = vrot.slane %v52, %v58
    %v61 = vmul.f32 %v59, %v53
    %v62 = vmul.f32 %v59, %v54
    %v63 = vld [vmem:[%s2] sm:$0x1]
    %v65 = vlaneseq
    %v66 = vshrl.u32 %v65, 7
    %v67 = vsub.s32 0, %v66
    %v68 = vrot.slane %v63, %v67
    %v70 = vadd.f32 %v61, %v68
    %v71 = vadd.f32 %v62, %v68
    %72 = vst [vmem:[#allocation5] sm:$0xff] %v70
    %73 = vst [vmem:[#allocation5 + $0x8] sm:$0xff] %v71
    // Predicated region
    $region18: #{tpu_custom_call.1} parent=1 // pred_check
      _
    $region19: #{tpu_custom_call.1} parent=1 // pred_check_branch
      %75 = sbr.rel (0) target = $region21
    $region20: #{tpu_custom_call.1} parent=1 // pred_region
      %s77 = ssub.s32 256, 256
      %78 = vsyncadd [#allocation4], %s77
      %s79 = sshll.u32 [#allocation5], 4
      %s80 = int_to_ptr.vmem [resolvable:$true] %s79
      %85 = dma.vmem_to_hbm [thread:$0]  %s80, 256, %s3, [#allocation4], 128, 128, 8
    $region21: #{tpu_custom_call.1} parent=1 // pred_fallthru
      _
    // Predicated region
    $region22: #{tpu_custom_call.1} parent=1 // pred_check
      _
    $region23: #{tpu_custom_call.1} parent=1 // pred_check_branch
      %87 = sbr.rel (0) target = $region25
    $region24: #{tpu_custom_call.1} parent=1 // pred_region
      %88 = dma.done [#allocation4], 256
    $region25: #{tpu_custom_call.1} parent=1 // pred_fallthru
      _
    %89 = vsyncpa [#allocation3], 1
    %90 = vsyncpa [#allocation4], 1

</llo_original>
